<compile_context>
chip_gen: v6e
topology: v6e:2x2x1
jax: 0.10.0
libtpu: 0.0.40
codegen_flags: <defaults>
</compile_context>

<pallas_src>
import jax
import jax.numpy as jnp
import numpy as np
from jax import lax
from jax.experimental import pallas as pl
from jax.experimental.pallas import tpu as pltpu

IMG = 5
N_CHANN = 10
K = 3
OUT_SP = IMG - K + 1                 # 3
N_SP = OUT_SP * OUT_SP               # 9
LIN_IN = N_CHANN * N_SP              # 90
FLAT_IN = N_CHANN * IMG * IMG        # 250
N_OUT = 2


def fused_kernel(x_ref, w_ref, b_ref, out_ref):
    """Single fused matmul per batch tile.

    x_ref:   (TB, 250)  flattened NCHW input tile (f32 or bf16)
    w_ref:   (250, 2)   effective (conv ∘ linear) weight (same dtype as x)
    b_ref:   (1, 2)     effective bias (f32)
    out_ref: (TB, 2)    f32
    """
    out_ref[...] = (
        jnp.dot(x_ref[...], w_ref[...], preferred_element_type=jnp.float32)
        + b_ref[...]
    )


def prepare_params(w_conv, b_conv, w_lin, b_lin):
    """One-time, parameter-only math composing conv1 + flatten + linear into
    a single affine map on the flattened NCHW input. Reuse across calls."""
    # Probe the conv's linear map with an identity batch: row i of conv_map is
    # the flattened (bias-free) conv response to the i-th basis image.
    eye = jnp.eye(FLAT_IN, dtype=jnp.float32).reshape(FLAT_IN, N_CHANN, IMG, IMG)
    conv_map = lax.conv_general_dilated(
        eye, w_conv, window_strides=(1, 1), padding="VALID",
        dimension_numbers=("NCHW", "OIHW", "NCHW"),
    ).reshape(FLAT_IN, LIN_IN)                               # (250, 90)

    w_eff = conv_map @ w_lin.T                               # (250, 2)
    # Conv bias contributes b_conv[o] at every flat index o*9 + p.
    bias_flat = jnp.repeat(b_conv, N_SP)                     # (90,)
    b_eff = (bias_flat @ w_lin.T + b_lin).reshape(1, N_OUT)  # (1, 2)
    return w_eff, b_eff


def _round_up(x, m):
    return (x + m - 1) // m * m


def net_autograd_forward(x, w_eff, b_eff, *, tb=4096, use_bf16_activations=False):
    """Pallas-backed forward pass matching Net_AutoGrad.forward.

    x:     (B, 10, 5, 5) float32, NCHW
    w_eff: (250, 2), b_eff: (1, 2)  — from prepare_params (precomputed once)
    tb:    batch tile upper bound (sweep 2048-8192; 4096 fits every
           generation's scoped VMEM default with headroom).
    """
    B = x.shape[0]
    x2d = x.reshape(B, FLAT_IN)            # NCHW flatten; wrapper-side, free.

    if use_bf16_activations:
        # Halves the dominant HBM stream; MXU is natively bf16 on all gens.
        x2d = x2d.astype(jnp.bfloat16)
        w_eff = w_eff.astype(jnp.bfloat16)  # 2 KB — negligible either way.

    # Batch tile: multiple of 8 sublanes, capped so the grid has >= 2 steps
    # (keeps both v7x TensorCores busy; harmless on single-TC v5e/v6e).
    TB = min(_round_up(tb, 8), _round_up(pl.cdiv(B, 2), 8))
    grid = (pl.cdiv(B, TB),)               # ragged: last block is partial.

    x_item = x2d.dtype.itemsize
    w_item = w_eff.dtype.itemsize
    cost = pl.CostEstimate(
        flops=2 * B * FLAT_IN * N_OUT,
        transcendentals=0,
        bytes_accessed=(B * FLAT_IN * x_item        # activation stream
                        + FLAT_IN * N_OUT * w_item  # weight
                        + N_OUT * 4                 # bias
                        + B * N_OUT * 4),           # output
    )

    out = pl.pallas_call(
        fused_kernel,
        out_shape=jax.ShapeDtypeStruct((B, N_OUT), jnp.float32),
        grid=grid,
        in_specs=[
            pl.BlockSpec((TB, FLAT_IN), lambda i: (i, 0)),
            pl.BlockSpec((FLAT_IN, N_OUT), lambda i: (0, 0)),
            pl.BlockSpec((1, N_OUT), lambda i: (0, 0)),
        ],
        out_specs=pl.BlockSpec((TB, N_OUT), lambda i: (i, 0)),
        compiler_params=pltpu.CompilerParams(
            dimension_semantics=("parallel",),
            vmem_limit_bytes=32 * 1024 * 1024),
        cost_estimate=cost,
    )(x2d, w_eff, b_eff)

    return out


def reference_forward(x, w_conv, b_conv, w_lin, b_lin):
    """Pure-JAX reference reproducing PyTorch semantics."""
    conv = lax.conv_general_dilated(
        x, w_conv, window_strides=(1, 1), padding="VALID",
        dimension_numbers=("NCHW", "OIHW", "NCHW"))
    conv = conv + b_conv[None, :, None, None]
    flat = conv.reshape(x.shape[0], -1)
    return flat @ w_lin.T + b_lin


if __name__ == "__main__":
    key = jax.random.PRNGKey(0)
    k_x, k_x2, k_wc, k_bc, k_wl, k_bl = jax.random.split(key, 6)

    # Deterministic parameter init (PyTorch-style uniform bounds).
    fan_conv = N_CHANN * K * K
    bound_c = 1.0 / np.sqrt(fan_conv)
    w_conv = jax.random.uniform(k_wc, (N_CHANN, N_CHANN, K, K),
                                minval=-bound_c, maxval=bound_c,
                                dtype=jnp.float32)
    b_conv = jax.random.uniform(k_bc, (N_CHANN,),
                                minval=-bound_c, maxval=bound_c,
                                dtype=jnp.float32)
    bound_l = 1.0 / np.sqrt(LIN_IN)
    w_lin = jax.random.uniform(k_wl, (N_OUT, LIN_IN),
                               minval=-bound_l, maxval=bound_l,
                               dtype=jnp.float32)
    b_lin = jax.random.uniform(k_bl, (N_OUT,),
                               minval=-bound_l, maxval=bound_l,
                               dtype=jnp.float32)

    # One-time weight fusion (parameter-only math, reused across calls).
    w_eff, b_eff = prepare_params(w_conv, b_conv, w_lin, b_lin)
    w_eff = jax.block_until_ready(w_eff)

    # Small-batch check (B=2, single ragged block).
    B = 2
    x = jax.random.normal(k_x, (B, N_CHANN, IMG, IMG), dtype=jnp.float32)
    out = jax.block_until_ready(net_autograd_forward(x, w_eff, b_eff))
    ref = reference_forward(x, w_conv, b_conv, w_lin, b_lin)
    np.testing.assert_allclose(np.asarray(out), np.asarray(ref),
                               rtol=1e-4, atol=1e-5)
    assert out.shape == (B, N_OUT)

    # Larger odd batch with a small tile: exercises ragged multi-step grid.
    B2 = 37
    x2 = jax.random.normal(k_x2, (B2, N_CHANN, IMG, IMG), dtype=jnp.float32)
    out2 = jax.block_until_ready(net_autograd_forward(x2, w_eff, b_eff, tb=16))
    ref2 = reference_forward(x2, w_conv, b_conv, w_lin, b_lin)
    np.testing.assert_allclose(np.asarray(out2), np.asarray(ref2),
                               rtol=1e-4, atol=1e-5)
    assert out2.shape == (B2, N_OUT)

    # Optional bf16-activation streaming path (looser tolerance by design).
    out3 = jax.block_until_ready(
        net_autograd_forward(x2, w_eff, b_eff, tb=16,
                             use_bf16_activations=True))
    np.testing.assert_allclose(np.asarray(out3), np.asarray(ref2),
                               rtol=5e-2, atol=2e-2)

    print("KERNEL_OK")
</pallas_src>

<mosaic_0001>
module attributes {stable_mosaic.version = 11 : i64} {
  func.func @fused_kernel(%arg0: i32, %arg1: memref<8x250xf32, #tpu.memory_space<vmem>>, %arg2: memref<250x2xf32, #tpu.memory_space<vmem>>, %arg3: memref<1x2xf32, #tpu.memory_space<vmem>>, %arg4: memref<8x2xf32, #tpu.memory_space<vmem>>) attributes {dimension_semantics = [#tpu.dimension_semantics<parallel>], iteration_bounds = array<i64: 1>, scalar_prefetch = 0 : i64, scratch_operands = 0 : i64, tpu.core_type = #tpu.core_type<tc>, window_params = [{transform_indices = @transform_0, window_bounds = array<i64: 8, 250>}, {pipeline_mode = #tpu.pipeline_mode<synchronous>, transform_indices = @transform_1, window_bounds = array<i64: 250, 2>}, {pipeline_mode = #tpu.pipeline_mode<synchronous>, transform_indices = @transform_2, window_bounds = array<i64: 1, 2>}, {transform_indices = @transform_3, window_bounds = array<i64: 8, 2>}]} {
    %c0 = arith.constant 0 : index
    %c0_0 = arith.constant 0 : index
    %0 = vector.load %arg1[%c0, %c0_0] : memref<8x250xf32, #tpu.memory_space<vmem>>, vector<8x250xf32>
    %c0_1 = arith.constant 0 : index
    %c0_2 = arith.constant 0 : index
    %1 = vector.load %arg2[%c0_1, %c0_2] : memref<250x2xf32, #tpu.memory_space<vmem>>, vector<250x2xf32>
    %cst = arith.constant dense<0.000000e+00> : vector<8x2xf32>
    %2 = tpu.matmul %0, %1, %cst {dimension_numbers = #tpu.dot_dimension_numbers<[1], [0], [0], [1], [0, 0, 1, 1], [], []>} : vector<8x250xf32>, vector<250x2xf32>, vector<8x2xf32> -> vector<8x2xf32>
    %c0_3 = arith.constant 0 : index
    %c0_4 = arith.constant 0 : index
    %3 = vector.load %arg3[%c0_3, %c0_4] : memref<1x2xf32, #tpu.memory_space<vmem>>, vector<1x2xf32>
    %4 = vector.broadcast %3 : vector<1x2xf32> to vector<8x2xf32>
    %5 = arith.addf %2, %4 : vector<8x2xf32>
    %c0_5 = arith.constant 0 : index
    %c0_6 = arith.constant 0 : index
    %6 = vector.load %arg4[%c0_5, %c0_6] : memref<8x2xf32, #tpu.memory_space<vmem>>, vector<8x2xf32>
    tpu.vector_store %arg4[%c0_5, %c0_6], %5 {strides = array<i32>} : memref<8x2xf32, #tpu.memory_space<vmem>>, vector<8x2xf32>,
    return
  }
  func.func @transform_0(%arg0: i32) -> (i32, i32) {
    %c0_i32 = arith.constant 0 : i32
    %c0_i32_0 = arith.constant 0 : i32
    return %arg0, %c0_i32 : i32, i32
  }
  func.func @transform_1(%arg0: i32) -> (i32, i32) {
    %c0_i32 = arith.constant 0 : i32
    %c0_i32_0 = arith.constant 0 : i32
    %c0_i32_1 = arith.constant 0 : i32
    return %c0_i32, %c0_i32_0 : i32, i32
  }
  func.func @transform_2(%arg0: i32) -> (i32, i32) {
    %c0_i32 = arith.constant 0 : i32
    %c0_i32_0 = arith.constant 0 : i32
    %c0_i32_1 = arith.constant 0 : i32
    return %c0_i32, %c0_i32_0 : i32, i32
  }
  func.func @transform_3(%arg0: i32) -> (i32, i32) {
    %c0_i32 = arith.constant 0 : i32
    %c0_i32_0 = arith.constant 0 : i32
    return %arg0, %c0_i32 : i32, i32
  }
}

</mosaic_0001>

<llo_original>
// kernel: tpu_custom_call.1
$region0: #{tpu_custom_call.1}
  #allocation0 [shape = 'u32[]', space=smem, size = 0x4, offset = 0x4, fixed_abs, tag = 'smem constant byte address 0x4 - core index']
  #allocation1 [shape = 'u32[144,128]{1,0:T(1,128)}', space=vmem, size = 0x12000, scoped, tag = 'internal scratch']
  %s0 = inlined_call_operand.vmem [shape: f32[2,250], index: 0, kind: input, shape index: {}]
  %s1 = inlined_call_operand.vmem [shape: f32[250,2], index: 1, kind: input, shape index: {}]
  %s2 = inlined_call_operand.vmem [shape: f32[1,2], index: 2, kind: input, shape index: {}]
  %s3 = inlined_call_operand.hbm [shape: f32[2,2], index: 3, kind: output, shape index: {}]
  %s4 = sld [smem:[#allocation0]]
  $region22: #{tpu_custom_call.1} parent=0
    _
  %s6 = ssub.s32 1, %s4
  %s7 = scalar_select 0, %s6, %s4
  $region1: #{tpu_custom_call.1} parent=0
    #allocation2 [shape = 'u8[4096]{0}', space=vmem, size = 0x1000, scoped, tag = 'output window, operand 0, single buffered']
    #allocation3 [shape = 's32[1]{0}', space=sflag, size = 0x4, scoped, tag = 'scoped memory for tpu_custom_call.1']
    %8 = vsyncpa [#allocation3], 0
    // Predicated region
    $region2: #{tpu_custom_call.1} parent=1 // pred_check
      _
    $region3: #{tpu_custom_call.1} parent=1 // pred_check_branch
      %10 = sbr.rel (0) target = $region5
    $region4: #{tpu_custom_call.1} parent=1 // pred_region
      _
    $region5: #{tpu_custom_call.1} parent=1 // pred_fallthru
      _
    // Predicated region
    $region6: #{tpu_custom_call.1} parent=1 // pred_check
      _
    $region7: #{tpu_custom_call.1} parent=1 // pred_check_branch
      %12 = sbr.rel (0) target = $region9
    $region8: #{tpu_custom_call.1} parent=1 // pred_region
      _
    $region9: #{tpu_custom_call.1} parent=1 // pred_fallthru
      _
    // Predicated region
    $region10: #{tpu_custom_call.1} parent=1 // pred_check
      _
    $region11: #{tpu_custom_call.1} parent=1 // pred_check_branch
      %14 = sbr.rel (0) target = $region13
    $region12: #{tpu_custom_call.1} parent=1 // pred_region
      _
    $region13: #{tpu_custom_call.1} parent=1 // pred_fallthru
      _
    %v15 = vld [vmem:[%s0] sm:$0xf]
    %v16 = vld [vmem:[%s0 + $0x4] sm:$0xf]
    %v17 = vld [vmem:[%s0 + $0x8] sm:$0xf]
    %v18 = vld [vmem:[%s0 + $0xc] sm:$0xf]
    %v19 = vld [vmem:[%s1] sm:$0xff]
    %v20 = vld [vmem:[%s1 + $0x8] sm:$0xff]
    %v21 = vld [vmem:[%s1 + $0x10] sm:$0xff]
    %v22 = vld [vmem:[%s1 + $0x18] sm:$0xff]
    %v23 = vld [vmem:[%s1 + $0x20] sm:$0xff]
    %v24 = vld [vmem:[%s1 + $0x28] sm:$0xff]
    %v25 = vld [vmem:[%s1 + $0x30] sm:$0xff]
    %v26 = vld [vmem:[%s1 + $0x38] sm:$0xff]
    %v27 = vld [vmem:[%s1 + $0x40] sm:$0xff]
    %v28 = vld [vmem:[%s1 + $0x48] sm:$0xff]
    %v29 = vld [vmem:[%s1 + $0x50] sm:$0xff]
    %v30 = vld [vmem:[%s1 + $0x58] sm:$0xff]
    %v31 = vld [vmem:[%s1 + $0x60] sm:$0xff]
    %v32 = vld [vmem:[%s1 + $0x68] sm:$0xff]
    %v33 = vld [vmem:[%s1 + $0x70] sm:$0xff]
    %v34 = vld [vmem:[%s1 + $0x78] sm:$0xff]
    %v35 = vld [vmem:[%s1 + $0x80] sm:$0xff]
    %v36 = vld [vmem:[%s1 + $0x88] sm:$0xff]
    %v37 = vld [vmem:[%s1 + $0x90] sm:$0xff]
    %v38 = vld [vmem:[%s1 + $0x98] sm:$0xff]
    %v39 = vld [vmem:[%s1 + $0xa0] sm:$0xff]
    %v40 = vld [vmem:[%s1 + $0xa8] sm:$0xff]
    %v41 = vld [vmem:[%s1 + $0xb0] sm:$0xff]
    %v42 = vld [vmem:[%s1 + $0xb8] sm:$0xff]
    %v43 = vld [vmem:[%s1 + $0xc0] sm:$0xff]
    %v44 = vld [vmem:[%s1 + $0xc8] sm:$0xff]
    %v45 = vld [vmem:[%s1 + $0xd0] sm:$0xff]
    %v46 = vld [vmem:[%s1 + $0xd8] sm:$0xff]
    %v47 = vld [vmem:[%s1 + $0xe0] sm:$0xff]
    %v48 = vld [vmem:[%s1 + $0xe8] sm:$0xff]
    %v49 = vld [vmem:[%s1 + $0xf0] sm:$0xff]
    %v50 = vld [vmem:[%s1 + $0xf8] sm:$0x3]
    %v51 = vld [vmem:[%s2] sm:$0x1]
    %v53 = vlaneseq
    %v54 = vshrl.u32 %v53, 7
    %v55 = vsub.s32 0, %v54
    %v56 = vrot.slane %v51, %v55
    %v62 = vcombine.low %v15, %v16
    %v63 = vcombine.low %v17, %v18
    %v65 = vunpack.c.l.s4 1983009808
    %v66 = vunpack.c.0.s8 %v65
    %v67 = vlaneseq
    %v68 = vshrl.u32 %v67, 7
    %v69 = vsub.s32 %v66, %v68
    %v70 = vrot.slane %v62, %v69
    %v72 = vunpack.c.l.s4 1983009808
    %v73 = vunpack.c.0.s8 %v72
    %v74 = vlaneseq
    %v75 = vshrl.u32 %v74, 7
    %v76 = vsub.s32 %v73, %v75
    %v77 = vrot.slane %v63, %v76
    %v78 = vcombine.low %v70, %v77
    %v79 = vcombine.high %v70, %v77
    %vm81 = vcmask 998400
    %v82 = vsel %vm81, %v79, 0
    %vm84 = vcmask 1041408
    %v86 = vsel %vm84, %v50, 0
    %88 = vmatprep.subr.mxu0 0.0
    %89 = vmatpush1.msra.mxu0 %v34
    %90 = vmatprep.subr.mxu0 0.0
    %91 = vmatpush1.msra.mxu0 %v33
    %92 = vmatprep.subr.mxu0 0.0
    %93 = vmatpush1.msra.mxu0 %v32
    %94 = vmatprep.subr.mxu0 0.0
    %95 = vmatpush1.msra.mxu0 %v31
    %96 = vmatprep.subr.mxu0 0.0
    %97 = vmatpush1.msra.mxu0 %v30
    %98 = vmatprep.subr.mxu0 0.0
    %99 = vmatpush1.msra.mxu0 %v29
    %100 = vmatprep.subr.mxu0 0.0
    %101 = vmatpush1.msra.mxu0 %v28
    %102 = vmatprep.subr.mxu0 0.0
    %103 = vmatpush1.msra.mxu0 %v27
    %104 = vmatprep.subr.mxu0 0.0
    %105 = vmatpush1.msra.mxu0 %v26
    %106 = vmatprep.subr.mxu0 0.0
    %107 = vmatpush1.msra.mxu0 %v25
    %108 = vmatprep.subr.mxu0 0.0
    %109 = vmatpush1.msra.mxu0 %v24
    %110 = vmatprep.subr.mxu0 0.0
    %111 = vmatpush1.msra.mxu0 %v23
    %112 = vmatprep.subr.mxu0 0.0
    %113 = vmatpush1.msra.mxu0 %v22
    %114 = vmatprep.subr.mxu0 0.0
    %115 = vmatpush1.msra.mxu0 %v21
    %116 = vmatprep.subr.mxu0 0.0
    %117 = vmatpush1.msra.mxu0 %v20
    %118 = vmatprep.subr.mxu0 0.0
    %119 = vmatpush1.msra.mxu0 %v19
    %120 = vmatprep.subr.mxu0 0.0
    %121 = vmatpush2.msra.mxu0 %v86
    %122 = vmatprep.subr.mxu0 0.0
    %123 = vmatpush2.msra.mxu0 %v49
    %124 = vmatprep.subr.mxu0 0.0
    %125 = vmatpush2.msra.mxu0 %v48
    %126 = vmatprep.subr.mxu0 0.0
    %127 = vmatpush2.msra.mxu0 %v47
    %128 = vmatprep.subr.mxu0 0.0
    %129 = vmatpush2.msra.mxu0 %v46
    %130 = vmatprep.subr.mxu0 0.0
    %131 = vmatpush2.msra.mxu0 %v45
    %132 = vmatprep.subr.mxu0 0.0
    %133 = vmatpush2.msra.mxu0 %v44
    %134 = vmatprep.subr.mxu0 0.0
    %135 = vmatpush2.msra.mxu0 %v43
    %136 = vmatprep.subr.mxu0 0.0
    %137 = vmatpush2.msra.mxu0 %v42
    %138 = vmatprep.subr.mxu0 0.0
    %139 = vmatpush2.msra.mxu0 %v41
    %140 = vmatprep.subr.mxu0 0.0
    %141 = vmatpush2.msra.mxu0 %v40
    %142 = vmatprep.subr.mxu0 0.0
    %143 = vmatpush2.msra.mxu0 %v39
    %144 = vmatprep.subr.mxu0 0.0
    %145 = vmatpush2.msra.mxu0 %v38
    %146 = vmatprep.subr.mxu0 0.0
    %147 = vmatpush2.msra.mxu0 %v37
    %148 = vmatprep.subr.mxu0 0.0
    %149 = vmatpush2.msra.mxu0 %v36
    %150 = vmatprep.subr.mxu0 0.0
    %151 = vmatpush2.msra.mxu0 %v35
    %152 = vmatprep.mubr.f32.mxu0 %v82
    %153 = vmatmul.mubr.f32.gmra.mxu0 %v78
    %v154 = vpop.f32.mrf.mxu0
    %v155 = vadd.f32 %v56, %v154
    %v156 = vpop.f32.mrf.mxu0
    %157 = vdwg.mxu0
    %vm158 = vcmask 15360
    %159 = vst.msk [vmem:[#allocation2] sm:$0xff] %vm158, %v155
    // Predicated region
    $region14: #{tpu_custom_call.1} parent=1 // pred_check
      _
    $region15: #{tpu_custom_call.1} parent=1 // pred_check_branch
      %161 = sbr.rel (0) target = $region17
    $region16: #{tpu_custom_call.1} parent=1 // pred_region
      %s163 = ssub.s32 128, 32
      %164 = vsyncadd [#allocation3], %s163
      %s165 = sshll.u32 [#allocation2], 4
      %s166 = int_to_ptr.vmem [resolvable:$true] %s165
      %171 = dma.vmem_to_hbm [thread:$0]  %s166, 32, %s3, [#allocation3], 32, 32, 2
    $region17: #{tpu_custom_call.1} parent=1 // pred_fallthru
      _
    // Predicated region
    $region18: #{tpu_custom_call.1} parent=1 // pred_check
      _
    $region19: #{tpu_custom_call.1} parent=1 // pred_check_branch
      %173 = sbr.rel (0) target = $region21
    $region20: #{tpu_custom_call.1} parent=1 // pred_region
      %174 = dma.done [#allocation3], 128
    $region21: #{tpu_custom_call.1} parent=1 // pred_fallthru
      _
    %175 = vsyncpa [#allocation3], 1

</llo_original>
